<compile_context>
chip_gen: v7x
topology: tpu7x:2x2x1
jax: 0.10.0
libtpu: 0.0.40
codegen_flags: <defaults>
</compile_context>

<pallas_src>
import functools
import math

import jax
import jax.numpy as jnp
from jax.experimental import pallas as pl
from jax.experimental.pallas import tpu as pltpu

_SQRT_2_OVER_PI = math.sqrt(2.0 / math.pi)
_INV_SQRT2 = 1.0 / math.sqrt(2.0)


def _round_up(x, m):
    return ((x + m - 1) // m) * m


# --------------------------------------------------------------------------- #
# One-time feature probe: can this jax build single-buffer a constant-index    #
# operand via pipeline_mode=pl.Buffered(buffer_count=1)?                       #
# --------------------------------------------------------------------------- #
@functools.lru_cache(maxsize=None)
def _single_buffer_supported():
    def _probe_kernel(x_ref, o_ref):
        o_ref[...] = x_ref[...] * 2.0

    try:
        spec = pl.BlockSpec((8, 128), lambda i: (0, 0),
                            pipeline_mode=pl.Buffered(buffer_count=1))
        fn = pl.pallas_call(
            _probe_kernel,
            out_shape=jax.ShapeDtypeStruct((8, 128), jnp.float32),
            grid=(1,),
            in_specs=[spec],
            out_specs=pl.BlockSpec((8, 128), lambda i: (0, 0)),
        )
        jax.block_until_ready(fn(jnp.zeros((8, 128), jnp.float32)))
        return True
    except Exception:
        return False


@functools.lru_cache(maxsize=None)
def _vmem_capacity_bytes():
    try:
        return int(pltpu.get_tpu_info().vmem_capacity_bytes)
    except Exception:
        return 64 * 1024 * 1024  # conservative (v7x per-core) fallback


# --------------------------------------------------------------------------- #
# Kernel                                                                       #
# --------------------------------------------------------------------------- #
def _gelu(h_f32, *, approximate, compute_dtype):
    """GELU of an f32 tensor, returned in `compute_dtype` (the fc2 feed dtype)."""
    if approximate:
        # tanh approximation: transcendental goes to the EUP slot (free under an
        # MXU-bound kernel).  Evaluated in the fc2-feed dtype (bf16 when weights
        # are bf16 -> 2x vreg packing on v6e/v7x).  ~1e-3 deviation vs exact erf.
        h = h_f32.astype(compute_dtype)
        c = jnp.asarray(_SQRT_2_OVER_PI, compute_dtype)
        k = jnp.asarray(0.044715, compute_dtype)
        half = jnp.asarray(0.5, compute_dtype)
        one = jnp.asarray(1.0, compute_dtype)
        return half * h * (one + jnp.tanh(c * (h + k * h * h * h)))
    # Exact erf GELU (torch.nn.GELU default), evaluated in f32.
    return (0.5 * h_f32 * (1.0 + jax.lax.erf(h_f32 * _INV_SQRT2))).astype(compute_dtype)


def _mlp_kernel(x_ref, w1_ref, b1_ref, w2_ref, b2_ref, o_ref, acc_ref, *,
                approximate):
    # Grid: (m_tile, h_panel).  The h_panel axis is a reduction over the hidden
    # dimension of fc2; the output block is resident across it.
    p = pl.program_id(1)

    @pl.when(p == 0)
    def _():
        acc_ref[...] = jnp.zeros_like(acc_ref)

    # fc1 panel: feed the MXU in the stored dtype, accumulate in f32.
    h = jnp.dot(x_ref[...], w1_ref[...], preferred_element_type=jnp.float32)
    h = h + b1_ref[...].astype(jnp.float32)

    # GELU (dropout p=0.0 -> identity, no RNG needed).
    g = _gelu(h, approximate=approximate, compute_dtype=w2_ref.dtype)

    # fc2 panel: partial contraction over this H panel, f32 accumulation.
    acc_ref[...] += jnp.dot(g, w2_ref[...], preferred_element_type=jnp.float32)

    @pl.when(p == pl.num_programs(1) - 1)
    def _():
        o_ref[...] = (acc_ref[...] + b2_ref[...].astype(jnp.float32)).astype(o_ref.dtype)


# --------------------------------------------------------------------------- #
# Wrapper                                                                      #
# --------------------------------------------------------------------------- #
def _choose_h_panels(c_in, h_dim, c_out, w_itemsize, budget_bytes, single_buffer):
    """Smallest H-panel count whose weight working set fits the VMEM budget."""
    def weight_bytes(k, n_buf):
        th = h_dim // k
        return n_buf * w_itemsize * (c_in * th + th * c_out + th + c_out)

    candidates = [1]
    for k in range(2, max(2, h_dim // 128) + 1):
        if h_dim % k == 0 and (h_dim // k) % 128 == 0:
            candidates.append(k)

    for k in candidates:
        n_buf = (1 if single_buffer else 2) if k == 1 else 2
        if weight_bytes(k, n_buf) <= budget_bytes:
            return k
    # Nothing fits comfortably: stream with the finest legal panels.
    return candidates[-1]


def _vmem_limit_bytes(tm, c_in, th, c_out, act_itemsize, w_itemsize, n_wbuf,
                      vmem_cap):
    weights = n_wbuf * w_itemsize * (c_in * th + th * c_out + th + c_out)
    act = 2 * act_itemsize * tm * (c_in + c_out)       # double-buffered x / out tiles
    inter = 4 * tm * (th + 2 * c_out)                  # f32 intermediates + acc scratch
    est = 2 * (weights + act + inter)                  # headroom for compiler temps
    return int(min(max(est, 32 * 1024 * 1024), int(0.9 * vmem_cap)))


def mlp_pallas(x, w1, b1, w2, b2, *, tm=512, approximate_gelu=True,
               h_panels=None):
    """Mlp forward: fc2(gelu(fc1(x))), dropout p=0.

    x : (..., C_in).  w1: (C_in, H), b1: (H,), w2: (H, C_out), b2: (C_out,)
    (nn.Linear weights stored transposed, i.e. (in_features, out_features)).

    For best throughput store weights/activations in bf16 (MXU fast path); the
    kernel always accumulates in f32.  C_in / H / C_out should be multiples of
    128 (true for ViT-style dims such as C=384, H=1536).
    """
    lead = x.shape[:-1]
    C_in = x.shape[-1]
    H = w1.shape[1]
    C_out = w2.shape[1]
    M = 1
    for d in lead:
        M *= d

    single_buf = _single_buffer_supported()
    vmem_cap = _vmem_capacity_bytes()
    w_itemsize = jnp.dtype(w1.dtype).itemsize
    act_itemsize = jnp.dtype(x.dtype).itemsize

    # ---- H-panel count (1 == fully resident weights) -------------------------
    if h_panels is not None:
        num_h = int(h_panels)
        if num_h < 1 or H % num_h != 0 or (num_h > 1 and (H // num_h) % 128 != 0):
            raise ValueError(f"invalid h_panels={h_panels} for H={H}")
    else:
        num_h = _choose_h_panels(C_in, H, C_out, w_itemsize,
                                 budget_bytes=int(0.45 * vmem_cap),
                                 single_buffer=single_buf)
    th = H // num_h

    # ---- Row tile: large, 8-aligned, but always >= 2 grid steps when M > 8
    # (keeps both v7x TensorCores busy on short sequences). ---------------------
    tm = int(tm)
    tm = max(8, min(_round_up(tm, 8), _round_up(pl.cdiv(M, 2), 8)))
    num_m = pl.cdiv(M, tm)  # last tile may be partial; Pallas masks OOB writes.

    x2d = x.reshape(M, C_in)
    b1_2d = b1.reshape(1, H)
    b2_2d = b2.reshape(1, C_out)

    use_single = single_buf and (num_h == 1)

    def _const_spec(shape, single_buffer):
        index_map = lambda i, p, _n=len(shape): (0,) * _n
        if single_buffer:
            return pl.BlockSpec(shape, index_map,
                                pipeline_mode=pl.Buffered(buffer_count=1))
        return pl.BlockSpec(shape, index_map)

    if num_h == 1:
        w1_spec = _const_spec((C_in, H), use_single)
        b1_spec = _const_spec((1, H), use_single)
        w2_spec = _const_spec((H, C_out), use_single)
    else:
        # Stream H panels: column panels of w1 / row panels of w2.
        w1_spec = pl.BlockSpec((C_in, th), lambda i, p: (0, p))
        b1_spec = pl.BlockSpec((1, th), lambda i, p: (0, p))
        w2_spec = pl.BlockSpec((th, C_out), lambda i, p: (p, 0))
    b2_spec = _const_spec((1, C_out), single_buf)

    n_wbuf = 1 if use_single else 2
    vmem_limit = _vmem_limit_bytes(tm, C_in, th, C_out, act_itemsize, w_itemsize,
                                   n_wbuf, vmem_cap)

    kernel = functools.partial(_mlp_kernel, approximate=approximate_gelu)

    out2d = pl.pallas_call(
        kernel,
        out_shape=jax.ShapeDtypeStruct((M, C_out), x.dtype),
        grid_spec=pltpu.PrefetchScalarGridSpec(
            num_scalar_prefetch=0,
            grid=(num_m, num_h),
            in_specs=[
                pl.BlockSpec((tm, C_in), lambda i, p: (i, 0)),   # x row tile
                w1_spec,                                          # w1 (panel)
                b1_spec,                                          # b1 (panel)
                w2_spec,                                          # w2 (panel)
                b2_spec,                                          # b2
            ],
            out_specs=pl.BlockSpec((tm, C_out), lambda i, p: (i, 0)),
            scratch_shapes=[pltpu.VMEM((tm, C_out), jnp.float32)],
        ),
        compiler_params=pltpu.CompilerParams(
            dimension_semantics=("parallel", "arbitrary"),
            vmem_limit_bytes=vmem_limit),
    )(x2d, w1, b1_2d, w2, b2_2d)

    return out2d.reshape(*lead, C_out)


# --------------------------------------------------------------------------- #
# Reference + self-test                                                        #
# --------------------------------------------------------------------------- #
def _reference_mlp(x, w1, b1, w2, b2):
    h = jnp.einsum("bnc,ch->bnh", x, w1,
                   precision=jax.lax.Precision.HIGHEST) + b1
    h = 0.5 * h * (1.0 + jax.lax.erf(h / jnp.sqrt(2.0).astype(h.dtype)))
    return jnp.einsum("bnh,hc->bnc", h, w2,
                      precision=jax.lax.Precision.HIGHEST) + b2


if __name__ == "__main__":
    # Small transformer-style shapes (lane-aligned C, hidden = 4 * dim as in
    # Block(mlp_ratio=4.0)).
    B, N = 2, 8
    C = 128          # in_features = out_features
    H = 4 * C        # hidden_features

    key = jax.random.PRNGKey(0)
    kx, kw1, kb1, kw2, kb2, kx2 = jax.random.split(key, 6)

    x = jax.random.normal(kx, (B, N, C), dtype=jnp.float32)

    # nn.Linear-like uniform init, stored transposed: (in_features, out_features).
    bound1 = 1.0 / math.sqrt(C)
    w1 = jax.random.uniform(kw1, (C, H), jnp.float32, -bound1, bound1)
    b1 = jax.random.uniform(kb1, (H,), jnp.float32, -bound1, bound1)
    bound2 = 1.0 / math.sqrt(H)
    w2 = jax.random.uniform(kw2, (H, C), jnp.float32, -bound2, bound2)
    b2 = jax.random.uniform(kb2, (C,), jnp.float32, -bound2, bound2)

    y_ref = _reference_mlp(x, w1, b1, w2, b2)

    # 1) f32 weights + exact erf GELU (torch.nn.GELU default semantics).
    y = jax.block_until_ready(mlp_pallas(x, w1, b1, w2, b2, approximate_gelu=False))
    assert y.shape == (B, N, C)
    assert jnp.allclose(y, y_ref, atol=1e-4, rtol=1e-4), "f32/exact-GELU mismatch"

    # 2) bf16 weights/activations + tanh-approx GELU (fast MXU + EUP path).
    xb, w1b, b1b, w2b, b2b = (a.astype(jnp.bfloat16) for a in (x, w1, b1, w2, b2))
    yb = jax.block_until_ready(mlp_pallas(xb, w1b, b1b, w2b, b2b,
                                          approximate_gelu=True))
    assert yb.shape == (B, N, C)
    assert jnp.allclose(yb.astype(jnp.float32), y_ref, atol=5e-2, rtol=5e-2), \
        "bf16/approx-GELU mismatch"

    # 3) Exercise the H-panel streaming path (forced 2 panels) together with a
    #    ragged last row tile (M = 18 not divisible by the tile) - no HBM-side
    #    padding or slicing is performed.
    x_rag = jax.random.normal(kx2, (2, 9, C), dtype=jnp.float32)
    y_rag_ref = _reference_mlp(x_rag, w1, b1, w2, b2)
    y_rag = jax.block_until_ready(
        mlp_pallas(x_rag, w1, b1, w2, b2, approximate_gelu=False, h_panels=2))
    assert y_rag.shape == (2, 9, C)
    assert jnp.allclose(y_rag, y_rag_ref, atol=1e-4, rtol=1e-4), \
        "H-panel / ragged-tile mismatch"

    print("KERNEL_OK")
</pallas_src>

<mosaic_0001>
module attributes {stable_mosaic.version = 11 : i64} {
  func.func @_probe_kernel(%arg0: i32, %arg1: memref<8x128xf32, #tpu.memory_space<vmem>>, %arg2: memref<8x128xf32, #tpu.memory_space<vmem>>) attributes {dimension_semantics = [#tpu.dimension_semantics<arbitrary>], iteration_bounds = array<i64: 1>, scalar_prefetch = 0 : i64, scratch_operands = 0 : i64, tpu.core_type = #tpu.core_type<tc>, window_params = [{pipeline_mode = #tpu.pipeline_mode<synchronous>, transform_indices = @transform_0, window_bounds = array<i64: 8, 128>}, {pipeline_mode = #tpu.pipeline_mode<synchronous>, transform_indices = @transform_1, window_bounds = array<i64: 8, 128>}]} {
    %c0 = arith.constant 0 : index
    %c0_0 = arith.constant 0 : index
    %0 = vector.load %arg1[%c0, %c0_0] : memref<8x128xf32, #tpu.memory_space<vmem>>, vector<8x128xf32>
    %cst = arith.constant 2.000000e+00 : f32
    %1 = vector.broadcast %cst : f32 to vector<8x128xf32>
    %2 = arith.mulf %0, %1 : vector<8x128xf32>
    %c0_1 = arith.constant 0 : index
    %c0_2 = arith.constant 0 : index
    %3 = vector.load %arg2[%c0_1, %c0_2] : memref<8x128xf32, #tpu.memory_space<vmem>>, vector<8x128xf32>
    tpu.vector_store %arg2[%c0_1, %c0_2], %2 {strides = array<i32>} : memref<8x128xf32, #tpu.memory_space<vmem>>, vector<8x128xf32>,
    return
  }
  func.func @transform_0(%arg0: i32) -> (i32, i32) {
    %c0_i32 = arith.constant 0 : i32
    %c0_i32_0 = arith.constant 0 : i32
    %c0_i32_1 = arith.constant 0 : i32
    return %c0_i32, %c0_i32_0 : i32, i32
  }
  func.func @transform_1(%arg0: i32) -> (i32, i32) {
    %c0_i32 = arith.constant 0 : i32
    %c0_i32_0 = arith.constant 0 : i32
    %c0_i32_1 = arith.constant 0 : i32
    return %c0_i32, %c0_i32_0 : i32, i32
  }
}

module attributes {stable_mosaic.version = 11 : i64} {
  func.func @_mlp_kernel(%arg0: i32, %arg1: i32, %arg2: memref<8x128xf32, #tpu.memory_space<vmem>>, %arg3: memref<128x512xf32, #tpu.memory_space<vmem>>, %arg4: memref<1x512xf32, #tpu.memory_space<vmem>>, %arg5: memref<512x128xf32, #tpu.memory_space<vmem>>, %arg6: memref<1x128xf32, #tpu.memory_space<vmem>>, %arg7: memref<8x128xf32, #tpu.memory_space<vmem>>, %arg8: memref<8x128xf32, #tpu.memory_space<vmem>>) attributes {dimension_semantics = [#tpu.dimension_semantics<parallel>, #tpu.dimension_semantics<arbitrary>], iteration_bounds = array<i64: 2, 1>, scalar_prefetch = 0 : i64, scratch_operands = 1 : i64, tpu.core_type = #tpu.core_type<tc>, window_params = [{transform_indices = @transform_0, window_bounds = array<i64: 8, 128>}, {pipeline_mode = #tpu.pipeline_mode<synchronous>, transform_indices = @transform_1, window_bounds = array<i64: 128, 512>}, {pipeline_mode = #tpu.pipeline_mode<synchronous>, transform_indices = @transform_2, window_bounds = array<i64: 1, 512>}, {pipeline_mode = #tpu.pipeline_mode<synchronous>, transform_indices = @transform_3, window_bounds = array<i64: 512, 128>}, {pipeline_mode = #tpu.pipeline_mode<synchronous>, transform_indices = @transform_4, window_bounds = array<i64: 1, 128>}, {transform_indices = @transform_5, window_bounds = array<i64: 8, 128>}]} {
    %c0_i32 = arith.constant 0 : i32
    %0 = arith.cmpi eq, %arg1, %c0_i32 : i32
    %1 = arith.extui %0 : i1 to i32
    %c0_i32_0 = arith.constant 0 : i32
    %2 = arith.cmpi ne, %1, %c0_i32_0 : i32
    scf.if %2 {
      %cst_18 = arith.constant 0.000000e+00 : f32
      %25 = vector.broadcast %cst_18 : f32 to vector<8x128xf32>
      %c0_19 = arith.constant 0 : index
      %c0_20 = arith.constant 0 : index
      %26 = vector.load %arg8[%c0_19, %c0_20] : memref<8x128xf32, #tpu.memory_space<vmem>>, vector<8x128xf32>
      tpu.vector_store %arg8[%c0_19, %c0_20], %25 {strides = array<i32>} : memref<8x128xf32, #tpu.memory_space<vmem>>, vector<8x128xf32>,
    } else {
    }
    %c0 = arith.constant 0 : index
    %c0_1 = arith.constant 0 : index
    %3 = vector.load %arg2[%c0, %c0_1] : memref<8x128xf32, #tpu.memory_space<vmem>>, vector<8x128xf32>
    %c0_2 = arith.constant 0 : index
    %c0_3 = arith.constant 0 : index
    %4 = vector.load %arg3[%c0_2, %c0_3] : memref<128x512xf32, #tpu.memory_space<vmem>>, vector<128x512xf32>
    %cst = arith.constant dense<0.000000e+00> : vector<8x512xf32>
    %5 = tpu.matmul %3, %4, %cst {dimension_numbers = #tpu.dot_dimension_numbers<[1], [0], [0], [1], [0, 0, 1, 1], [], []>} : vector<8x128xf32>, vector<128x512xf32>, vector<8x512xf32> -> vector<8x512xf32>
    %c0_4 = arith.constant 0 : index
    %c0_5 = arith.constant 0 : index
    %6 = vector.load %arg4[%c0_4, %c0_5] : memref<1x512xf32, #tpu.memory_space<vmem>>, vector<1x512xf32>
    %7 = vector.broadcast %6 : vector<1x512xf32> to vector<8x512xf32>
    %8 = arith.addf %5, %7 : vector<8x512xf32>
    %cst_6 = arith.constant 5.000000e-01 : f32
    %9 = vector.broadcast %cst_6 : f32 to vector<8x512xf32>
    %10 = arith.mulf %9, %8 : vector<8x512xf32>
    %cst_7 = arith.constant 0.707106769 : f32
    %11 = vector.broadcast %cst_7 : f32 to vector<8x512xf32>
    %12 = arith.mulf %8, %11 : vector<8x512xf32>
    %13 = math.erf %12 : vector<8x512xf32>
    %cst_8 = arith.constant 1.000000e+00 : f32
    %14 = vector.broadcast %cst_8 : f32 to vector<8x512xf32>
    %15 = arith.addf %14, %13 : vector<8x512xf32>
    %16 = arith.mulf %10, %15 : vector<8x512xf32>
    %c0_9 = arith.constant 0 : index
    %c0_10 = arith.constant 0 : index
    %17 = vector.load %arg8[%c0_9, %c0_10] : memref<8x128xf32, #tpu.memory_space<vmem>>, vector<8x128xf32>
    %c0_11 = arith.constant 0 : index
    %c0_12 = arith.constant 0 : index
    %18 = vector.load %arg5[%c0_11, %c0_12] : memref<512x128xf32, #tpu.memory_space<vmem>>, vector<512x128xf32>
    %cst_13 = arith.constant dense<0.000000e+00> : vector<8x128xf32>
    %19 = tpu.matmul %16, %18, %cst_13 {dimension_numbers = #tpu.dot_dimension_numbers<[1], [0], [0], [1], [0, 0, 1, 1], [], []>} : vector<8x512xf32>, vector<512x128xf32>, vector<8x128xf32> -> vector<8x128xf32>
    %20 = arith.addf %17, %19 : vector<8x128xf32>
    %c0_14 = arith.constant 0 : index
    %c0_15 = arith.constant 0 : index
    %21 = vector.load %arg8[%c0_14, %c0_15] : memref<8x128xf32, #tpu.memory_space<vmem>>, vector<8x128xf32>
    tpu.vector_store %arg8[%c0_14, %c0_15], %20 {strides = array<i32>} : memref<8x128xf32, #tpu.memory_space<vmem>>, vector<8x128xf32>,
    %c0_i32_16 = arith.constant 0 : i32
    %22 = arith.cmpi eq, %arg1, %c0_i32_16 : i32
    %23 = arith.extui %22 : i1 to i32
    %c0_i32_17 = arith.constant 0 : i32
    %24 = arith.cmpi ne, %23, %c0_i32_17 : i32
    scf.if %24 {
      %c0_18 = arith.constant 0 : index
      %c0_19 = arith.constant 0 : index
      %25 = vector.load %arg8[%c0_18, %c0_19] : memref<8x128xf32, #tpu.memory_space<vmem>>, vector<8x128xf32>
      %c0_20 = arith.constant 0 : index
      %c0_21 = arith.constant 0 : index
      %26 = vector.load %arg6[%c0_20, %c0_21] : memref<1x128xf32, #tpu.memory_space<vmem>>, vector<1x128xf32>
      %27 = vector.broadcast %26 : vector<1x128xf32> to vector<8x128xf32>
      %28 = arith.addf %25, %27 : vector<8x128xf32>
      %c0_22 = arith.constant 0 : index
      %c0_23 = arith.constant 0 : index
      %29 = vector.load %arg7[%c0_22, %c0_23] : memref<8x128xf32, #tpu.memory_space<vmem>>, vector<8x128xf32>
      tpu.vector_store %arg7[%c0_22, %c0_23], %28 {strides = array<i32>} : memref<8x128xf32, #tpu.memory_space<vmem>>, vector<8x128xf32>,
    } else {
    }
    return
  }
  func.func @transform_0(%arg0: i32, %arg1: i32) -> (i32, i32) {
    %c0_i32 = arith.constant 0 : i32
    %c0_i32_0 = arith.constant 0 : i32
    return %arg0, %c0_i32 : i32, i32
  }
  func.func @transform_1(%arg0: i32, %arg1: i32) -> (i32, i32) {
    %c0_i32 = arith.constant 0 : i32
    %c0_i32_0 = arith.constant 0 : i32
    %c0_i32_1 = arith.constant 0 : i32
    return %c0_i32, %c0_i32_0 : i32, i32
  }
  func.func @transform_2(%arg0: i32, %arg1: i32) -> (i32, i32) {
    %c0_i32 = arith.constant 0 : i32
    %c0_i32_0 = arith.constant 0 : i32
    %c0_i32_1 = arith.constant 0 : i32
    return %c0_i32, %c0_i32_0 : i32, i32
  }
  func.func @transform_3(%arg0: i32, %arg1: i32) -> (i32, i32) {
    %c0_i32 = arith.constant 0 : i32
    %c0_i32_0 = arith.constant 0 : i32
    %c0_i32_1 = arith.constant 0 : i32
    return %c0_i32, %c0_i32_0 : i32, i32
  }
  func.func @transform_4(%arg0: i32, %arg1: i32) -> (i32, i32) {
    %c0_i32 = arith.constant 0 : i32
    %c0_i32_0 = arith.constant 0 : i32
    %c0_i32_1 = arith.constant 0 : i32
    return %c0_i32, %c0_i32_0 : i32, i32
  }
  func.func @transform_5(%arg0: i32, %arg1: i32) -> (i32, i32) {
    %c0_i32 = arith.constant 0 : i32
    %c0_i32_0 = arith.constant 0 : i32
    return %arg0, %c0_i32 : i32, i32
  }
}

</mosaic_0001>

<llo_original>
// kernel: tpu_custom_call.1
$region0: #{tpu_custom_call.1}
  #allocation0 [shape = 'u32[]', space=smem, size = 0x4, offset = 0x4, fixed_abs, tag = 'smem constant byte address 0x4 - core index']
  #allocation1 [shape = 'u32[144,128]{1,0:T(1,128)}', space=vmem, size = 0x12000, scoped, tag = 'internal scratch']
  %s0 = inlined_call_operand.hbm [shape: f32[8,128], index: 0, kind: input, shape index: {}]
  %s1 = inlined_call_operand.hbm [shape: f32[8,128], index: 1, kind: output, shape index: {}]
  %s2 = sld [smem:[#allocation0]]
  $region18: #{tpu_custom_call.1} parent=0
    _
  %s4 = ssub.s32 1, %s2
  %s5 = scalar_select 0, %s4, %s2
  $region1: #{tpu_custom_call.1} parent=0
    #allocation2 [shape = 'u8[4096]{0}', space=vmem, size = 0x1000, scoped, tag = 'input window, operand 0, single buffered']
    #allocation3 [shape = 's32[1]{0}', space=sflag, size = 0x4, scoped, tag = 'scoped memory for tpu_custom_call.1']
    #allocation4 [shape = 's32[1]{0}', space=sflag, size = 0x4, scoped, tag = 'scoped memory for tpu_custom_call.1']
    #allocation5 [shape = 'u8[4096]{0}', space=vmem, size = 0x1000, scoped, tag = 'output window, operand 0, single buffered']
    %6 = vsyncpa [#allocation3], 0
    %7 = vsyncpa [#allocation4], 0
    // Predicated region
    $region2: #{tpu_custom_call.1} parent=1 // pred_check
      _
    $region3: #{tpu_custom_call.1} parent=1 // pred_check_branch
      %9 = sbr.rel (0) target = $region5
    $region4: #{tpu_custom_call.1} parent=1 // pred_region
      %s11 = ssub.s32 128, 128
      %12 = vsyncadd [#allocation3], %s11
      %s14 = sshll.u32 [#allocation2], 4
      %s15 = int_to_ptr.vmem [resolvable:$true] %s14
      %17 = dma.hbm_to_vmem [thread:$0]  %s0, 128, %s15, [#allocation3]
    $region5: #{tpu_custom_call.1} parent=1 // pred_fallthru
      _
    // Predicated region
    $region6: #{tpu_custom_call.1} parent=1 // pred_check
      _
    $region7: #{tpu_custom_call.1} parent=1 // pred_check_branch
      %19 = sbr.rel (0) target = $region9
    $region8: #{tpu_custom_call.1} parent=1 // pred_region
      %20 = dma.done [#allocation3], 128
    $region9: #{tpu_custom_call.1} parent=1 // pred_fallthru
      _
    %v21 = vld [vmem:[#allocation2] sm:$0xff]
    %v22 = vmul.f32 %v21, 2.0
    %23 = vst [vmem:[#allocation5] sm:$0xff] %v22
    // Predicated region
    $region10: #{tpu_custom_call.1} parent=1 // pred_check
      _
    $region11: #{tpu_custom_call.1} parent=1 // pred_check_branch
      %25 = sbr.rel (0) target = $region13
    $region12: #{tpu_custom_call.1} parent=1 // pred_region
      %s27 = ssub.s32 128, 128
      %28 = vsyncadd [#allocation4], %s27
      %s30 = sshll.u32 [#allocation5], 4
      %s31 = int_to_ptr.vmem [resolvable:$true] %s30
      %33 = dma.vmem_to_hbm [thread:$0]  %s31, 128, %s1, [#allocation4]
    $region13: #{tpu_custom_call.1} parent=1 // pred_fallthru
      _
    // Predicated region
    $region14: #{tpu_custom_call.1} parent=1 // pred_check
      _
    $region15: #{tpu_custom_call.1} parent=1 // pred_check_branch
      %35 = sbr.rel (0) target = $region17
    $region16: #{tpu_custom_call.1} parent=1 // pred_region
      %36 = dma.done [#allocation4], 128
    $region17: #{tpu_custom_call.1} parent=1 // pred_fallthru
      _
    %37 = vsyncpa [#allocation3], 1
    %38 = vsyncpa [#allocation4], 1

// kernel: tpu_custom_call.1
$region0: #{tpu_custom_call.1}
  #allocation0 [shape = 'u32[]', space=smem, size = 0x4, offset = 0x4, fixed_abs, tag = 'smem constant byte address 0x4 - core index']
  #allocation1 [shape = 'u32[144,128]{1,0:T(1,128)}', space=vmem, size = 0x12000, scoped, tag = 'internal scratch']
  #allocation2 [shape = 'f32[8,128]{1,0:T(8,128)}', space=vmem, size = 0x1000, scoped, tag = 'scratch operand']
  %s0 = inlined_call_operand.hbm [shape: f32[16,128], index: 0, kind: input, shape index: {}]
  %s1 = inlined_call_operand.hbm [shape: f32[128,512], index: 1, kind: input, shape index: {}]
  %s2 = inlined_call_operand.vmem [shape: f32[1,512], index: 2, kind: input, shape index: {}]
  %s3 = inlined_call_operand.hbm [shape: f32[512,128], index: 3, kind: input, shape index: {}]
  %s4 = inlined_call_operand.vmem [shape: f32[1,128], index: 4, kind: input, shape index: {}]
  %s5 = inlined_call_operand.hbm [shape: f32[16,128], index: 5, kind: output, shape index: {}]
  %s6 = sld [smem:[#allocation0]]
  $region73: #{tpu_custom_call.1} parent=0
    _
  %s8 = ssub.s32 1, %s6
  %s9 = scalar_select 0, %s8, %s6
  $region1: #{tpu_custom_call.1} parent=0
    #allocation3 [shape = 'u8[8192]{0}', space=vmem, size = 0x2000, scoped, tag = 'input window, operand 0']
    #allocation4 [shape = 's32[2]{0}', space=sflag, size = 0x8, scoped, tag = 'scoped memory for tpu_custom_call.1']
    #allocation5 [shape = 's32[2]{0}', space=sflag, size = 0x8, scoped, tag = 'scoped memory for tpu_custom_call.1']
    #allocation6 [shape = 'u8[262144]{0}', space=vmem, size = 0x40000, scoped, tag = 'input window, operand 1, single buffered']
    #allocation7 [shape = 's32[1]{0}', space=sflag, size = 0x4, scoped, tag = 'scoped memory for tpu_custom_call.1']
    #allocation8 [shape = 'u8[262144]{0}', space=vmem, size = 0x40000, scoped, tag = 'input window, operand 3, single buffered']
    #allocation9 [shape = 'u8[8192]{0}', space=vmem, size = 0x2000, scoped, tag = 'output window, operand 0']
    %10 = vsyncpa [#allocation4], 0
    %s11 = scalar_lea.sflag [#allocation4], 1
    %12 = vsyncpa %s11, 0
    %13 = vsyncpa [#allocation7], 0
    %14 = vsyncpa [#allocation5], 0
    %s15 = scalar_lea.sflag [#allocation5], 1
    %16 = vsyncpa %s15, 0
    loop: start=0, step=1, limit=4
    $region2: #{tpu_custom_call.1} parent=1 // loop_pre_header
      _
    $region3: #{tpu_custom_call.1} parent=1 // loop_header
      %s18 = sphi 0, %s22
      %p19 = scmp.ge.s32.totalorder %s18, 4
      %s25 = sphi 0, %s37
      %s26 = sphi 0, %s33
      %s27 = sphi 0, %s25
      %s28 = sphi 0, %s26
      %s29 = sphi 0, %s27
      %s30 = sphi 0, %s28
      %s40 = sphi 0, %s42
      %s43 = sphi 0, %s40
      %s44 = sphi 0, %s43
      %s60 = sphi 0, %s44
      %s64 = sphi 0, %s64
      %s66 = sphi 0, %s64
      %s67 = sphi 0, %s66
      %s81 = sphi 0, %s67
      %s85 = sphi 0, %s85
      %s87 = sphi 0, %s85
      %s88 = sphi 0, %s87
      %s102 = sphi 0, %s88
      %s106 = sphi 0, %s106
      %s108 = sphi 0, %s106
      %s109 = sphi 0, %s108
      %s123 = sphi 0, %s109
      %s127 = sphi 0, %s127
      %s129 = sphi 0, %s127
      %s130 = sphi 0, %s129
      %s144 = sphi 0, %s130
      %s150 = sphi 0, %s152
      %s153 = sphi 0, %s150
      %s154 = sphi 0, %s153
      %s170 = sphi 0, %s154
    $region4: #{tpu_custom_call.1} parent=1 // loop_header_branch
      %21 = sbr.rel (%p19) target = $region8
    $region5: #{tpu_custom_call.1} parent=1 // loop_body
      %s23 = ssub.s32 %s18, 1
      %s24 = ssub.s32 %s18, 2
      %s31 = sadd.s32 1, %s26
      %p32 = scmp.ge.s32.totalorder %s31, 1
      %s33 = scalar_select %p32, 0, %s31
      %s34 = sadd.s32 1, %s25
      %s35 = scalar_select %p32, %s34, %s25
      %p36 = scmp.ge.s32.totalorder %s35, 2
      %s37 = scalar_select %p36, 0, %s35
      %s38 = ssub.s32 %s25, %s37
      %p39 = scmp.eq.s32.totalorder %s38, 0
      %s41 = sadd.s32 %s40, 1
      %s42 = scalar_select %p39, %s40, %s41
      %p45 = pneg %p39
      %p46 = scmp.eq.s32.totalorder %s18, 1
      %p47 = por %p45, %p46
      %p48 = scmp.ne.s32.totalorder %s40, %s43
      %p49 = scmp.eq.s32.totalorder %s18, 0
      %p50 = por %p48, %p49
      %p51 = scmp.ne.s32.totalorder %s40, %s43
      %p52 = scmp.eq.s32.totalorder %s23, 1
      %p53 = por %p51, %p52
      %p54 = scmp.ne.s32.totalorder %s43, %s44
      %p55 = scmp.eq.s32.totalorder %s23, 0
      %p56 = por %p54, %p55
      %p57 = scmp.ne.s32.totalorder %s43, %s44
      %p58 = scmp.eq.s32.totalorder %s24, 1
      %p59 = por %p57, %p58
      %p61 = scmp.ne.s32.totalorder %s44, %s60
      %p62 = scmp.eq.s32.totalorder %s24, 0
      %p63 = por %p61, %p62
      %s65 = sadd.s32 %s64, 1
      %p68 = scmp.eq.s32.totalorder %s18, 1
      %p69 = scmp.ne.s32.totalorder %s64, %s66
      %p70 = scmp.eq.s32.totalorder %s18, 0
      %p71 = por %p69, %p70
      %p72 = scmp.ne.s32.totalorder %s64, %s66
      %p73 = scmp.eq.s32.totalorder %s23, 1
      %p74 = por %p72, %p73
      %p75 = scmp.ne.s32.totalorder %s66, %s67
      %p76 = scmp.eq.s32.totalorder %s23, 0
      %p77 = por %p75, %p76
      %p78 = scmp.ne.s32.totalorder %s66, %s67
      %p79 = scmp.eq.s32.totalorder %s24, 1
      %p80 = por %p78, %p79
      %p82 = scmp.ne.s32.totalorder %s67, %s81
      %p83 = scmp.eq.s32.totalorder %s24, 0
      %p84 = por %p82, %p83
      %s86 = sadd.s32 %s85, 1
      %p89 = scmp.eq.s32.totalorder %s18, 1
      %p90 = scmp.ne.s32.totalorder %s85, %s87
      %p91 = scmp.eq.s32.totalorder %s18, 0
      %p92 = por %p90, %p91
      %p93 = scmp.ne.s32.totalorder %s85, %s87
      %p94 = scmp.eq.s32.totalorder %s23, 1
      %p95 = por %p93, %p94
      %p96 = scmp.ne.s32.totalorder %s87, %s88
      %p97 = scmp.eq.s32.totalorder %s23, 0
      %p98 = por %p96, %p97
      %p99 = scmp.ne.s32.totalorder %s87, %s88
      %p100 = scmp.eq.s32.totalorder %s24, 1
      %p101 = por %p99, %p100
      %p103 = scmp.ne.s32.totalorder %s88, %s102
      %p104 = scmp.eq.s32.totalorder %s24, 0
      %p105 = por %p103, %p104
      %s107 = sadd.s32 %s106, 1
      %p110 = scmp.eq.s32.totalorder %s18, 1
      %p111 = scmp.ne.s32.totalorder %s106, %s108
      %p112 = scmp.eq.s32.totalorder %s18, 0
      %p113 = por %p111, %p112
      %p114 = scmp.ne.s32.totalorder %s106, %s108
      %p115 = scmp.eq.s32.totalorder %s23, 1
      %p116 = por %p114, %p115
      %p117 = scmp.ne.s32.totalorder %s108, %s109
      %p118 = scmp.eq.s32.totalorder %s23, 0
      %p119 = por %p117, %p118
      %p120 = scmp.ne.s32.totalorder %s108, %s109
      %p121 = scmp.eq.s32.totalorder %s24, 1
      %p122 = por %p120, %p121
      %p124 = scmp.ne.s32.totalorder %s109, %s123
      %p125 = scmp.eq.s32.totalorder %s24, 0
      %p126 = por %p124, %p125
      %s128 = sadd.s32 %s127, 1
      %p131 = scmp.eq.s32.totalorder %s18, 1
      %p132 = scmp.ne.s32.totalorder %s127, %s129
      %p133 = scmp.eq.s32.totalorder %s18, 0
      %p134 = por %p132, %p133
      %p135 = scmp.ne.s32.totalorder %s127, %s129
      %p136 = scmp.eq.s32.totalorder %s23, 1
      %p137 = por %p135, %p136
      %p138 = scmp.ne.s32.totalorder %s129, %s130
      %p139 = scmp.eq.s32.totalorder %s23, 0
      %p140 = por %p138, %p139
      %p141 = scmp.ne.s32.totalorder %s129, %s130
      %p142 = scmp.eq.s32.totalorder %s24, 1
      %p143 = por %p141, %p142
      %p145 = scmp.ne.s32.totalorder %s130, %s144
      %p146 = scmp.eq.s32.totalorder %s24, 0
      %p147 = por %p145, %p146
      %s148 = ssub.s32 %s25, %s37
      %p149 = scmp.eq.s32.totalorder %s148, 0
      %s151 = sadd.s32 %s150, 1
      %s152 = scalar_select %p149, %s150, %s151
      %p155 = pneg %p149
      %p156 = scmp.eq.s32.totalorder %s18, 1
      %p157 = por %p155, %p156
      %p158 = scmp.ne.s32.totalorder %s150, %s153
      %p159 = scmp.eq.s32.totalorder %s18, 0
      %p160 = por %p158, %p159
      %p161 = scmp.ne.s32.totalorder %s150, %s153
      %p162 = scmp.eq.s32.totalorder %s23, 1
      %p163 = por %p161, %p162
      %p164 = scmp.ne.s32.totalorder %s153, %s154
      %p165 = scmp.eq.s32.totalorder %s23, 0
      %p166 = por %p164, %p165
      %p167 = scmp.ne.s32.totalorder %s153, %s154
      %p168 = scmp.eq.s32.totalorder %s24, 1
      %p169 = por %p167, %p168
      %p171 = scmp.ne.s32.totalorder %s154, %s170
      %p172 = scmp.eq.s32.totalorder %s24, 0
      %p173 = por %p171, %p172
      %p174 = scmp.le.s32.totalorder 1, %s18
      %p175 = scmp.lt.s32.totalorder %s18, 3
      %p176 = pnand %p174, %p175
      %p177 = pneg %p176
      // Predicated region
      $region9: #{tpu_custom_call.1} parent=5 // pred_check
        _
      $region10: #{tpu_custom_call.1} parent=5 // pred_check_branch
        %179 = sbr.rel (%p176) target = $region12
      $region11: #{tpu_custom_call.1} parent=5 // pred_region
        %s180 = ssub.s32 %s18, 1
        // Predicated region
        $region13: #{tpu_custom_call.1} parent=11 // pred_check
          %p181 = pneg %p77
        $region14: #{tpu_custom_call.1} parent=11 // pred_check_branch
          %183 = sbr.rel (%p181) target = $region16
        $region15: #{tpu_custom_call.1} parent=11 // pred_region
          %s185 = ssub.s32 8192, 8192
          %186 = vsyncadd [#allocation7], %s185
          %s187 = sshll.u32 [#allocation6], 4
          %s188 = int_to_ptr.vmem [resolvable:$true] %s187
          %193 = dma.hbm_to_vmem [thread:$0]  %s1, 8192, %s188, [#allocation7], 512, 512, 32
        $region16: #{tpu_custom_call.1} parent=11 // pred_fallthru
          _
        // Predicated region
        $region17: #{tpu_custom_call.1} parent=11 // pred_check
          %p194 = pneg %p98
        $region18: #{tpu_custom_call.1} parent=11 // pred_check_branch
          %196 = sbr.rel (%p194) target = $region20
        $region19: #{tpu_custom_call.1} parent=11 // pred_region
          _
        $region20: #{tpu_custom_call.1} parent=11 // pred_fallthru
          _
        // Predicated region
        $region21: #{tpu_custom_call.1} parent=11 // pred_check
          %p197 = pneg %p119
        $region22: #{tpu_custom_call.1} parent=11 // pred_check_branch
          %199 = sbr.rel (%p197) target = $region24
        $region23: #{tpu_custom_call.1} parent=11 // pred_region
          %s201 = ssub.s32 8192, 8192
          %202 = vsyncadd [#allocation7], %s201
          %s203 = sshll.u32 [#allocation8], 4
          %s204 = int_to_ptr.vmem [resolvable:$true] %s203
          %209 = dma.hbm_to_vmem [thread:$0]  %s3, 8192, %s204, [#allocation7], 128, 128, 8
        $region24: #{tpu_custom_call.1} parent=11 // pred_fallthru
          _
        // Predicated region
        $region25: #{tpu_custom_call.1} parent=11 // pred_check
          %p210 = pneg %p140
        $region26: #{tpu_custom_call.1} parent=11 // pred_check_branch
          %212 = sbr.rel (%p210) target = $region28
        $region27: #{tpu_custom_call.1} parent=11 // pred_region
          _
        $region28: #{tpu_custom_call.1} parent=11 // pred_fallthru
          _
      $region12: #{tpu_custom_call.1} parent=5 // pred_fallthru
        _
      %p213 = scmp.lt.s32.totalorder %s18, 2
      // Predicated region
      $region29: #{tpu_custom_call.1} parent=5 // pred_check
        %p214 = pneg %p213
      $region30: #{tpu_custom_call.1} parent=5 // pred_check_branch
        %216 = sbr.rel (%p214) target = $region32
      $region31: #{tpu_custom_call.1} parent=5 // pred_region
        // Predicated region
        $region33: #{tpu_custom_call.1} parent=31 // pred_check
          %p217 = pneg %p50
        $region34: #{tpu_custom_call.1} parent=31 // pred_check_branch
          %219 = sbr.rel (%p217) target = $region36
        $region35: #{tpu_custom_call.1} parent=31 // pred_region
          %s220 = sand.u32 %s40, 1
          %s221 = scalar_lea.sflag [#allocation4], %s220
          %s222 = sand.u32 %s40, 1
          %s223 = smul.addr %s222, 8
          %s224 = scalar_lea.vmem [#allocation3], %s223
          %s226 = ssub.s32 128, 128
          %227 = vsyncadd %s221, %s226
          %s228 = smul.addr %s25, 128
          %s229 = scalar_lea.hbm %s0, %s228
          %s231 = sshll.u32 %s224, 4
          %s232 = int_to_ptr.vmem [resolvable:$true] %s231
          %234 = dma.hbm_to_vmem [thread:$0]  %s229, 128, %s232, %s221
        $region36: #{tpu_custom_call.1} parent=31 // pred_fallthru
          _
      $region32: #{tpu_custom_call.1} parent=5 // pred_fallthru
        _
      %p235 = scmp.le.s32.totalorder 1, %s18
      %p236 = scmp.lt.s32.totalorder %s18, 3
      %p237 = pnand %p235, %p236
      %p238 = pneg %p237
      // Predicated region
      $region37: #{tpu_custom_call.1} parent=5 // pred_check
        _
      $region38: #{tpu_custom_call.1} parent=5 // pred_check_branch
        %240 = sbr.rel (%p237) target = $region40
      $region39: #{tpu_custom_call.1} parent=5 // pred_region
        %s241 = ssub.s32 %s18, 1
        %s242 = sand.u32 %s43, 1
        %s243 = scalar_lea.sflag [#allocation4], %s242
        %s244 = sand.u32 %s43, 1
        %s245 = smul.addr %s244, 8
        %s246 = scalar_lea.vmem [#allocation3], %s245
        // Predicated region
        $region41: #{tpu_custom_call.1} parent=39 // pred_check
          %p247 = pneg %p56
        $region42: #{tpu_custom_call.1} parent=39 // pred_check_branch
          %249 = sbr.rel (%p247) target = $region44
        $region43: #{tpu_custom_call.1} parent=39 // pred_region
          %250 = dma.done %s243, 128
        $region44: #{tpu_custom_call.1} parent=39 // pred_fallthru
          _
        // Predicated region
        $region45: #{tpu_custom_call.1} parent=39 // pred_check
          %p251 = pneg %p77
        $region46: #{tpu_custom_call.1} parent=39 // pred_check_branch
          %253 = sbr.rel (%p251) target = $region48
        $region47: #{tpu_custom_call.1} parent=39 // pred_region
          %254 = dma.done [#allocation7], 8192
        $region48: #{tpu_custom_call.1} parent=39 // pred_fallthru
          _
        // Predicated region
        $region49: #{tpu_custom_call.1} parent=39 // pred_check
          %p255 = pneg %p119
        $region50: #{tpu_custom_call.1} parent=39 // pred_check_branch
          %257 = sbr.rel (%p255) target = $region52
        $region51: #{tpu_custom_call.1} parent=39 // pred_region
          %258 = dma.done [#allocation7], 8192
        $region52: #{tpu_custom_call.1} parent=39 // pred_fallthru
          _
        %s259 = sand.u32 %s43, 1
        %s260 = scalar_lea.sflag [#allocation4], %s259
        %s261 = sand.u32 %s43, 1
        %s262 = smul.addr %s261, 8
        %s263 = scalar_lea.vmem [#allocation3], %s262
        %p264 = pneg %p56
        %p265 = pneg %p53
        %p266 = pneg %p77
        %p267 = pneg %p74
        %p268 = pneg %p98
        %p269 = pneg %p95
        %p270 = pneg %p119
        %p271 = pneg %p116
        %p272 = pneg %p140
        %p273 = pneg %p137
        %p274 = pneg %p166
        %p275 = pneg %p163
        %s276 = sand.u32 %s153, 1
        %s277 = scalar_lea.sflag [#allocation5], %s276
        %s278 = sand.u32 %s153, 1
        %s279 = smul.addr %s278, 8
        %s280 = scalar_lea.vmem [#allocation9], %s279
        %p281 = scmp.eq.s32.totalorder %s28, 0
        // Predicated region
        $region53: #{tpu_custom_call.1} parent=39 // pred_check
          %p282 = pneg %p281
        $region54: #{tpu_custom_call.1} parent=39 // pred_check_branch
          %284 = sbr.rel (%p282) target = $region56
        $region55: #{tpu_custom_call.1} parent=39 // pred_region
          %285 = vst [vmem:[#allocation2] sm:$0xff] 0.0
        $region56: #{tpu_custom_call.1} parent=39 // pred_fallthru
          _
        %v286 = vld [vmem:[%s246] sm:$0xff]
        %v287 = vld [vmem:[#allocation6] sm:$0xff]
        %v288 = vld [vmem:[#allocation6 + $0x8] sm:$0xff]
        %v289 = vld [vmem:[#allocation6 + $0x10] sm:$0xff]
        %v290 = vld [vmem:[#allocation6 + $0x18] sm:$0xff]
        %v291 = vld [vmem:[#allocation6 + $0x20] sm:$0xff]
        %v292 = vld [vmem:[#allocation6 + $0x28] sm:$0xff]
        %v293 = vld [vmem:[#allocation6 + $0x30] sm:$0xff]
        %v294 = vld [vmem:[#allocation6 + $0x38] sm:$0xff]
        %v295 = vld [vmem:[#allocation6 + $0x40] sm:$0xff]
        %v296 = vld [vmem:[#allocation6 + $0x48] sm:$0xff]
        %v297 = vld [vmem:[#allocation6 + $0x50] sm:$0xff]
        %v298 = vld [vmem:[#allocation6 + $0x58] sm:$0xff]
        %v299 = vld [vmem:[#allocation6 + $0x60] sm:$0xff]
        %v300 = vld [vmem:[#allocation6 + $0x68] sm:$0xff]
        %v301 = vld [vmem:[#allocation6 + $0x70] sm:$0xff]
        %v302 = vld [vmem:[#allocation6 + $0x78] sm:$0xff]
        %v303 = vld [vmem:[#allocation6 + $0x80] sm:$0xff]
        %v304 = vld [vmem:[#allocation6 + $0x88] sm:$0xff]
        %v305 = vld [vmem:[#allocation6 + $0x90] sm:$0xff]
        %v306 = vld [vmem:[#allocation6 + $0x98] sm:$0xff]
        %v307 = vld [vmem:[#allocation6 + $0xa0] sm:$0xff]
        %v308 = vld [vmem:[#allocation6 + $0xa8] sm:$0xff]
        %v309 = vld [vmem:[#allocation6 + $0xb0] sm:$0xff]
        %v310 = vld [vmem:[#allocation6 + $0xb8] sm:$0xff]
        %v311 = vld [vmem:[#allocation6 + $0xc0] sm:$0xff]
        %v312 = vld [vmem:[#allocation6 + $0xc8] sm:$0xff]
        %v313 = vld [vmem:[#allocation6 + $0xd0] sm:$0xff]
        %v314 = vld [vmem:[#allocation6 + $0xd8] sm:$0xff]
        %v315 = vld [vmem:[#allocation6 + $0xe0] sm:$0xff]
        %v316 = vld [vmem:[#allocation6 + $0xe8] sm:$0xff]
        %v317 = vld [vmem:[#allocation6 + $0xf0] sm:$0xff]
        %v318 = vld [vmem:[#allocation6 + $0xf8] sm:$0xff]
        %v319 = vld [vmem:[#allocation6 + $0x100] sm:$0xff]
        %v320 = vld [vmem:[#allocation6 + $0x108] sm:$0xff]
        %v321 = vld [vmem:[#allocation6 + $0x110] sm:$0xff]
        %v322 = vld [vmem:[#allocation6 + $0x118] sm:$0xff]
        %v323 = vld [vmem:[#allocation6 + $0x120] sm:$0xff]
        %v324 = vld [vmem:[#allocation6 + $0x128] sm:$0xff]
        %v325 = vld [vmem:[#allocation6 + $0x130] sm:$0xff]
        %v326 = vld [vmem:[#allocation6 + $0x138] sm:$0xff]
        %v327 = vld [vmem:[#allocation6 + $0x140] sm:$0xff]
        %v328 = vld [vmem:[#allocation6 + $0x148] sm:$0xff]
        %v329 = vld [vmem:[#allocation6 + $0x150] sm:$0xff]
        %v330 = vld [vmem:[#allocation6 + $0x158] sm:$0xff]
        %v331 = vld [vmem:[#allocation6 + $0x160] sm:$0xff]
        %v332 = vld [vmem:[#allocation6 + $0x168] sm:$0xff]
        %v333 = vld [vmem:[#allocation6 + $0x170] sm:$0xff]
        %v334 = vld [vmem:[#allocation6 + $0x178] sm:$0xff]
        %v335 = vld [vmem:[#allocation6 + $0x180] sm:$0xff]
        %v336 = vld [vmem:[#allocation6 + $0x188] sm:$0xff]
        %v337 = vld [vmem:[#allocation6 + $0x190] sm:$0xff]
        %v338 = vld [vmem:[#allocation6 + $0x198] sm:$0xff]
        %v339 = vld [vmem:[#allocation6 + $0x1a0] sm:$0xff]
        %v340 = vld [vmem:[#allocation6 + $0x1a8] sm:$0xff]
        %v341 = vld [vmem:[#allocation6 + $0x1b0] sm:$0xff]
        %v342 = vld [vmem:[#allocation6 + $0x1b8] sm:$0xff]
        %v343 = vld [vmem:[#allocation6 + $0x1c0] sm:$0xff]
        %v344 = vld [vmem:[#allocation6 + $0x1c8] sm:$0xff]
        %v345 = vld [vmem:[#allocation6 + $0x1d0] sm:$0xff]
        %v346 = vld [vmem:[#allocation6 + $0x1d8] sm:$0xff]
        %v347 = vld [vmem:[#allocation6 + $0x1e0] sm:$0xff]
        %v348 = vld [vmem:[#allocation6 + $0x1e8] sm:$0xff]
        %v349 = vld [vmem:[#allocation6 + $0x1f0] sm:$0xff]
        %v350 = vld [vmem:[#allocation6 + $0x1f8] sm:$0xff]
        %v351 = vld [vmem:[%s2] sm:$0xf]
        %v353 = vlaneseq
        %v354 = vshrl.u32 %v353, 7
        %v355 = vsub.s32 0, %v354
        %v356 = vrot.slane %v351, %v355
        %v357 = vlaneseq
        %v358 = vshrl.u32 %v357, 7
        %v359 = vsub.s32 1, %v358
        %v360 = vrot.slane %v351, %v359
        %v361 = vlaneseq
        %v362 = vshrl.u32 %v361, 7
        %v363 = vsub.s32 2, %v362
        %v364 = vrot.slane %v351, %v363
        %v365 = vlaneseq
        %v366 = vshrl.u32 %v365, 7
        %v367 = vsub.s32 3, %v366
        %v368 = vrot.slane %v351, %v367
        %373 = vmatprep.subr.mxu0 %v288
        %374 = vmatpush1.msra.mxu0 %v287
        %375 = vmatprep.subr.mxu0 %v292
        %376 = vmatpush1.msra.mxu0 %v291
        %377 = vmatprep.subr.mxu0 %v296
        %378 = vmatpush1.msra.mxu0 %v295
        %379 = vmatprep.subr.mxu0 %v300
        %380 = vmatpush1.msra.mxu0 %v299
        %381 = vmatprep.subr.mxu0 %v304
        %382 = vmatpush1.msra.mxu0 %v303
        %383 = vmatprep.subr.mxu0 %v308
        %384 = vmatpush1.msra.mxu0 %v307
        %385 = vmatprep.subr.mxu0 %v312
        %386 = vmatpush1.msra.mxu0 %v311
        %387 = vmatprep.subr.mxu0 %v316
        %388 = vmatpush1.msra.mxu0 %v315
        %389 = vmatprep.subr.mxu0 %v320
        %390 = vmatpush1.msra.mxu0 %v319
        %391 = vmatprep.subr.mxu0 %v324
        %392 = vmatpush1.msra.mxu0 %v323
        %393 = vmatprep.subr.mxu0 %v328
        %394 = vmatpush1.msra.mxu0 %v327
        %395 = vmatprep.subr.mxu0 %v332
        %396 = vmatpush1.msra.mxu0 %v331
        %397 = vmatprep.subr.mxu0 %v336
        %398 = vmatpush1.msra.mxu0 %v335
        %399 = vmatprep.subr.mxu0 %v340
        %400 = vmatpush1.msra.mxu0 %v339
        %401 = vmatprep.subr.mxu0 %v344
        %402 = vmatpush1.msra.mxu0 %v343
        %403 = vmatprep.subr.mxu0 %v348
        %404 = vmatpush1.msra.mxu0 %v347
        %405 = vmatprep.subr.mxu0 0.0
        %406 = vmatpush1.msra.mxu0 0.0
        %407 = vmatprep.subr.mxu0 0.0
        %408 = vmatpush1.msra.mxu0 0.0
        %409 = vmatprep.subr.mxu0 0.0
        %410 = vmatpush1.msra.mxu0 0.0
        %411 = vmatprep.subr.mxu0 0.0
        %412 = vmatpush1.msra.mxu0 0.0
        %413 = vmatprep.subr.mxu0 0.0
        %414 = vmatpush1.msra.mxu0 0.0
        %415 = vmatprep.subr.mxu0 0.0
        %416 = vmatpush1.msra.mxu0 0.0
        %417 = vmatprep.subr.mxu0 0.0
        %418 = vmatpush1.msra.mxu0 0.0
        %419 = vmatprep.subr.mxu0 0.0
        %420 = vmatpush1.msra.mxu0 0.0
        %421 = vmatprep.subr.mxu0 0.0
        %422 = vmatpush1.msra.mxu0 0.0
        %423 = vmatprep.subr.mxu0 0.0
        %424 = vmatpush1.msra.mxu0 0.0
        %425 = vmatprep.subr.mxu0 0.0
        %426 = vmatpush1.msra.mxu0 0.0
        %427 = vmatprep.subr.mxu0 0.0
        %428 = vmatpush1.msra.mxu0 0.0
        %429 = vmatprep.subr.mxu0 0.0
        %430 = vmatpush1.msra.mxu0 0.0
        %431 = vmatprep.subr.mxu0 0.0
        %432 = vmatpush1.msra.mxu0 0.0
        %433 = vmatprep.subr.mxu0 0.0
        %434 = vmatpush1.msra.mxu0 0.0
        %435 = vmatprep.subr.mxu0 0.0
        %436 = vmatpush1.msra.mxu0 0.0
        %437 = vmatprep.mubr.f32.mxu0 0.0
        %438 = vmatmul.mubr.f32.gmra.mrb[0].mxu0 %v286
        %v439 = vpop.f32.mrb[0].mxu0
        %v440 = vadd.f32 %v356, %v439
        %v441 = vpop.f32.mrb[0].mxu0
        %v442 = vadd.f32 %v360, %v441
        %443 = vdwg.mxu0
        %444 = vmatprep.subr.mxu0 %v290
        %445 = vmatpush1.msra.mxu0 %v289
        %446 = vmatprep.subr.mxu0 %v294
        %447 = vmatpush1.msra.mxu0 %v293
        %448 = vmatprep.subr.mxu0 %v298
        %449 = vmatpush1.msra.mxu0 %v297
        %450 = vmatprep.subr.mxu0 %v302
        %451 = vmatpush1.msra.mxu0 %v301
        %452 = vmatprep.subr.mxu0 %v306
        %453 = vmatpush1.msra.mxu0 %v305
        %454 = vmatprep.subr.mxu0 %v310
        %455 = vmatpush1.msra.mxu0 %v309
        %456 = vmatprep.subr.mxu0 %v314
        %457 = vmatpush1.msra.mxu0 %v313
        %458 = vmatprep.subr.mxu0 %v318
        %459 = vmatpush1.msra.mxu0 %v317
        %460 = vmatprep.subr.mxu0 %v322
        %461 = vmatpush1.msra.mxu0 %v321
        %462 = vmatprep.subr.mxu0 %v326
        %463 = vmatpush1.msra.mxu0 %v325
        %464 = vmatprep.subr.mxu0 %v330
        %465 = vmatpush1.msra.mxu0 %v329
        %466 = vmatprep.subr.mxu0 %v334
        %467 = vmatpush1.msra.mxu0 %v333
        %468 = vmatprep.subr.mxu0 %v338
        %469 = vmatpush1.msra.mxu0 %v337
        %470 = vmatprep.subr.mxu0 %v342
        %471 = vmatpush1.msra.mxu0 %v341
        %472 = vmatprep.subr.mxu0 %v346
        %473 = vmatpush1.msra.mxu0 %v345
        %474 = vmatprep.subr.mxu0 %v350
        %475 = vmatpush1.msra.mxu0 %v349
        %476 = vmatprep.subr.mxu0 0.0
        %477 = vmatpush1.msra.mxu0 0.0
        %478 = vmatprep.subr.mxu0 0.0
        %479 = vmatpush1.msra.mxu0 0.0
        %480 = vmatprep.subr.mxu0 0.0
        %481 = vmatpush1.msra.mxu0 0.0
        %482 = vmatprep.subr.mxu0 0.0
        %483 = vmatpush1.msra.mxu0 0.0
        %484 = vmatprep.subr.mxu0 0.0
        %485 = vmatpush1.msra.mxu0 0.0
        %486 = vmatprep.subr.mxu0 0.0
        %487 = vmatpush1.msra.mxu0 0.0
        %488 = vmatprep.subr.mxu0 0.0
        %489 = vmatpush1.msra.mxu0 0.0
        %490 = vmatprep.subr.mxu0 0.0
        %491 = vmatpush1.msra.mxu0 0.0
        %492 = vmatprep.subr.mxu0 0.0
        %493 = vmatpush1.msra.mxu0 0.0
        %494 = vmatprep.subr.mxu0 0.0
        %495 = vmatpush1.msra.mxu0 0.0
        %496 = vmatprep.subr.mxu0 0.0
        %497 = vmatpush1.msra.mxu0 0.0
        %498 = vmatprep.subr.mxu0 0.0
        %499 = vmatpush1.msra.mxu0 0.0
        %500 = vmatprep.subr.mxu0 0.0
        %501 = vmatpush1.msra.mxu0 0.0
        %502 = vmatprep.subr.mxu0 0.0
        %503 = vmatpush1.msra.mxu0 0.0
        %504 = vmatprep.subr.mxu0 0.0
        %505 = vmatpush1.msra.mxu0 0.0
        %506 = vmatprep.subr.mxu0 0.0
        %507 = vmatpush1.msra.mxu0 0.0
        %508 = vmatprep.mubr.f32.mxu0 0.0
        %509 = vmatmul.mubr.f32.gmra.mrb[0].mxu0 %v286
        %v510 = vpop.f32.mrb[0].mxu0
        %v511 = vadd.f32 %v364, %v510
        %v512 = vpop.f32.mrb[0].mxu0
        %v513 = vadd.f32 %v368, %v512
        %514 = vdwg.mxu0
        %v515 = vmul.f32 %v440, 0.5
        %v516 = vmul.f32 %v442, 0.5
        %v517 = vmul.f32 %v511, 0.5
        %v518 = vmul.f32 %v513, 0.5
        %v519 = vmul.f32 %v440, 0.70710677
        %v520 = vmul.f32 %v442, 0.70710677
        %v521 = vmul.f32 %v511, 0.70710677
        %v522 = vmul.f32 %v513, 0.70710677
        %v523 = verf.f32.pop %v519
        %v524 = verf.f32.pop %v520
        %v525 = verf.f32.pop %v521
        %v526 = verf.f32.pop %v522
        %v527 = vadd.f32 %v523, 1.0
        %v528 = vadd.f32 %v524, 1.0
        %v529 = vadd.f32 %v525, 1.0
        %v530 = vadd.f32 %v526, 1.0
        %v531 = vmul.f32 %v515, %v527
        %v532 = vmul.f32 %v516, %v528
        %v533 = vmul.f32 %v517, %v529
        %v534 = vmul.f32 %v518, %v530
        %v535 = vld [vmem:[#allocation2] sm:$0xff]
        %v536 = vld [vmem:[#allocation8] sm:$0xff]
        %v537 = vld [vmem:[#allocation8 + $0x8] sm:$0xff]
        %v538 = vld [vmem:[#allocation8 + $0x10] sm:$0xff]
        %v539 = vld [vmem:[#allocation8 + $0x18] sm:$0xff]
        %v540 = vld [vmem:[#allocation8 + $0x20] sm:$0xff]
        %v541 = vld [vmem:[#allocation8 + $0x28] sm:$0xff]
        %v542 = vld [vmem:[#allocation8 + $0x30] sm:$0xff]
        %v543 = vld [vmem:[#allocation8 + $0x38] sm:$0xff]
        %v544 = vld [vmem:[#allocation8 + $0x40] sm:$0xff]
        %v545 = vld [vmem:[#allocation8 + $0x48] sm:$0xff]
        %v546 = vld [vmem:[#allocation8 + $0x50] sm:$0xff]
        %v547 = vld [vmem:[#allocation8 + $0x58] sm:$0xff]
        %v548 = vld [vmem:[#allocation8 + $0x60] sm:$0xff]
        %v549 = vld [vmem:[#allocation8 + $0x68] sm:$0xff]
        %v550 = vld [vmem:[#allocation8 + $0x70] sm:$0xff]
        %v551 = vld [vmem:[#allocation8 + $0x78] sm:$0xff]
        %v552 = vld [vmem:[#allocation8 + $0x80] sm:$0xff]
        %v553 = vld [vmem:[#allocation8 + $0x88] sm:$0xff]
        %v554 = vld [vmem:[#allocation8 + $0x90] sm:$0xff]
        %v555 = vld [vmem:[#allocation8 + $0x98] sm:$0xff]
        %v556 = vld [vmem:[#allocation8 + $0xa0] sm:$0xff]
        %v557 = vld [vmem:[#allocation8 + $0xa8] sm:$0xff]
        %v558 = vld [vmem:[#allocation8 + $0xb0] sm:$0xff]
        %v559 = vld [vmem:[#allocation8 + $0xb8] sm:$0xff]
        %v560 = vld [vmem:[#allocation8 + $0xc0] sm:$0xff]
        %v561 = vld [vmem:[#allocation8 + $0xc8] sm:$0xff]
        %v562 = vld [vmem:[#allocation8 + $0xd0] sm:$0xff]
        %v563 = vld [vmem:[#allocation8 + $0xd8] sm:$0xff]
        %v564 = vld [vmem:[#allocation8 + $0xe0] sm:$0xff]
        %v565 = vld [vmem:[#allocation8 + $0xe8] sm:$0xff]
        %v566 = vld [vmem:[#allocation8 + $0xf0] sm:$0xff]
        %v567 = vld [vmem:[#allocation8 + $0xf8] sm:$0xff]
        %v568 = vld [vmem:[#allocation8 + $0x100] sm:$0xff]
        %v569 = vld [vmem:[#allocation8 + $0x108] sm:$0xff]
        %v570 = vld [vmem:[#allocation8 + $0x110] sm:$0xff]
        %v571 = vld [vmem:[#allocation8 + $0x118] sm:$0xff]
        %v572 = vld [vmem:[#allocation8 + $0x120] sm:$0xff]
        %v573 = vld [vmem:[#allocation8 + $0x128] sm:$0xff]
        %v574 = vld [vmem:[#allocation8 + $0x130] sm:$0xff]
        %v575 = vld [vmem:[#allocation8 + $0x138] sm:$0xff]
        %v576 = vld [vmem:[#allocation8 + $0x140] sm:$0xff]
        %v577 = vld [vmem:[#allocation8 + $0x148] sm:$0xff]
        %v578 = vld [vmem:[#allocation8 + $0x150] sm:$0xff]
        %v579 = vld [vmem:[#allocation8 + $0x158] sm:$0xff]
        %v580 = vld [vmem:[#allocation8 + $0x160] sm:$0xff]
        %v581 = vld [vmem:[#allocation8 + $0x168] sm:$0xff]
        %v582 = vld [vmem:[#allocation8 + $0x170] sm:$0xff]
        %v583 = vld [vmem:[#allocation8 + $0x178] sm:$0xff]
        %v584 = vld [vmem:[#allocation8 + $0x180] sm:$0xff]
        %v585 = vld [vmem:[#allocation8 + $0x188] sm:$0xff]
        %v586 = vld [vmem:[#allocation8 + $0x190] sm:$0xff]
        %v587 = vld [vmem:[#allocation8 + $0x198] sm:$0xff]
        %v588 = vld [vmem:[#allocation8 + $0x1a0] sm:$0xff]
        %v589 = vld [vmem:[#allocation8 + $0x1a8] sm:$0xff]
        %v590 = vld [vmem:[#allocation8 + $0x1b0] sm:$0xff]
        %v591 = vld [vmem:[#allocation8 + $0x1b8] sm:$0xff]
        %v592 = vld [vmem:[#allocation8 + $0x1c0] sm:$0xff]
        %v593 = vld [vmem:[#allocation8 + $0x1c8] sm:$0xff]
        %v594 = vld [vmem:[#allocation8 + $0x1d0] sm:$0xff]
        %v595 = vld [vmem:[#allocation8 + $0x1d8] sm:$0xff]
        %v596 = vld [vmem:[#allocation8 + $0x1e0] sm:$0xff]
        %v597 = vld [vmem:[#allocation8 + $0x1e8] sm:$0xff]
        %v598 = vld [vmem:[#allocation8 + $0x1f0] sm:$0xff]
        %v599 = vld [vmem:[#allocation8 + $0x1f8] sm:$0xff]
        %600 = vmatprep.subr.mxu0 0.0
        %601 = vmatpush1.msra.mxu0 %v536
        %602 = vmatprep.subr.mxu0 0.0
        %603 = vmatpush1.msra.mxu0 %v537
        %604 = vmatprep.subr.mxu0 0.0
        %605 = vmatpush1.msra.mxu0 %v538
        %606 = vmatprep.subr.mxu0 0.0
        %607 = vmatpush1.msra.mxu0 %v539
        %608 = vmatprep.subr.mxu0 0.0
        %609 = vmatpush1.msra.mxu0 %v540
        %610 = vmatprep.subr.mxu0 0.0
        %611 = vmatpush1.msra.mxu0 %v541
        %612 = vmatprep.subr.mxu0 0.0
        %613 = vmatpush1.msra.mxu0 %v542
        %614 = vmatprep.subr.mxu0 0.0
        %615 = vmatpush1.msra.mxu0 %v543
        %616 = vmatprep.subr.mxu0 0.0
        %617 = vmatpush1.msra.mxu0 %v544
        %618 = vmatprep.subr.mxu0 0.0
        %619 = vmatpush1.msra.mxu0 %v545
        %620 = vmatprep.subr.mxu0 0.0
        %621 = vmatpush1.msra.mxu0 %v546
        %622 = vmatprep.subr.mxu0 0.0
        %623 = vmatpush1.msra.mxu0 %v547
        %624 = vmatprep.subr.mxu0 0.0
        %625 = vmatpush1.msra.mxu0 %v548
        %626 = vmatprep.subr.mxu0 0.0
        %627 = vmatpush1.msra.mxu0 %v549
        %628 = vmatprep.subr.mxu0 0.0
        %629 = vmatpush1.msra.mxu0 %v550
        %630 = vmatprep.subr.mxu0 0.0
        %631 = vmatpush1.msra.mxu0 %v551
        %632 = vmatprep.subr.mxu0 0.0
        %633 = vmatpush1.msra.mxu0 %v552
        %634 = vmatprep.subr.mxu0 0.0
        %635 = vmatpush1.msra.mxu0 %v553
        %636 = vmatprep.subr.mxu0 0.0
        %637 = vmatpush1.msra.mxu0 %v554
        %638 = vmatprep.subr.mxu0 0.0
        %639 = vmatpush1.msra.mxu0 %v555
        %640 = vmatprep.subr.mxu0 0.0
        %641 = vmatpush1.msra.mxu0 %v556
        %642 = vmatprep.subr.mxu0 0.0
        %643 = vmatpush1.msra.mxu0 %v557
        %644 = vmatprep.subr.mxu0 0.0
        %645 = vmatpush1.msra.mxu0 %v558
        %646 = vmatprep.subr.mxu0 0.0
        %647 = vmatpush1.msra.mxu0 %v559
        %648 = vmatprep.subr.mxu0 0.0
        %649 = vmatpush1.msra.mxu0 %v560
        %650 = vmatprep.subr.mxu0 0.0
        %651 = vmatpush1.msra.mxu0 %v561
        %652 = vmatprep.subr.mxu0 0.0
        %653 = vmatpush1.msra.mxu0 %v562
        %654 = vmatprep.subr.mxu0 0.0
        %655 = vmatpush1.msra.mxu0 %v563
        %656 = vmatprep.subr.mxu0 0.0
        %657 = vmatpush1.msra.mxu0 %v564
        %658 = vmatprep.subr.mxu0 0.0
        %659 = vmatpush1.msra.mxu0 %v565
        %660 = vmatprep.subr.mxu0 0.0
        %661 = vmatpush1.msra.mxu0 %v566
        %662 = vmatprep.subr.mxu0 0.0
        %663 = vmatpush1.msra.mxu0 %v567
        %664 = vmatprep.mubr.f32.mxu0 %v532
        %665 = vmatmul.mubr.f32.gmra.mrb[0].mxu0 %v531
        %v666 = vpop.f32.mrb[0].mxu0
        %v667 = vadd.f32 0.0, %v666
        %v668 = vpop.f32.mrb[0].mxu0
        %669 = vdwg.mxu0
        %670 = vmatprep.subr.mxu0 0.0
        %671 = vmatpush1.msra.mxu0 %v568
        %672 = vmatprep.subr.mxu0 0.0
        %673 = vmatpush1.msra.mxu0 %v569
        %674 = vmatprep.subr.mxu0 0.0
        %675 = vmatpush1.msra.mxu0 %v570
        %676 = vmatprep.subr.mxu0 0.0
        %677 = vmatpush1.msra.mxu0 %v571
        %678 = vmatprep.subr.mxu0 0.0
        %679 = vmatpush1.msra.mxu0 %v572
        %680 = vmatprep.subr.mxu0 0.0
        %681 = vmatpush1.msra.mxu0 %v573
        %682 = vmatprep.subr.mxu0 0.0
        %683 = vmatpush1.msra.mxu0 %v574
        %684 = vmatprep.subr.mxu0 0.0
        %685 = vmatpush1.msra.mxu0 %v575
        %686 = vmatprep.subr.mxu0 0.0
        %687 = vmatpush1.msra.mxu0 %v576
        %688 = vmatprep.subr.mxu0 0.0
        %689 = vmatpush1.msra.mxu0 %v577
        %690 = vmatprep.subr.mxu0 0.0
        %691 = vmatpush1.msra.mxu0 %v578
        %692 = vmatprep.subr.mxu0 0.0
        %693 = vmatpush1.msra.mxu0 %v579
        %694 = vmatprep.subr.mxu0 0.0
        %695 = vmatpush1.msra.mxu0 %v580
        %696 = vmatprep.subr.mxu0 0.0
        %697 = vmatpush1.msra.mxu0 %v581
        %698 = vmatprep.subr.mxu0 0.0
        %699 = vmatpush1.msra.mxu0 %v582
        %700 = vmatprep.subr.mxu0 0.0
        %701 = vmatpush1.msra.mxu0 %v583
        %702 = vmatprep.subr.mxu0 0.0
        %703 = vmatpush1.msra.mxu0 %v584
        %704 = vmatprep.subr.mxu0 0.0
        %705 = vmatpush1.msra.mxu0 %v585
        %706 = vmatprep.subr.mxu0 0.0
        %707 = vmatpush1.msra.mxu0 %v586
        %708 = vmatprep.subr.mxu0 0.0
        %709 = vmatpush1.msra.mxu0 %v587
        %710 = vmatprep.subr.mxu0 0.0
        %711 = vmatpush1.msra.mxu0 %v588
        %712 = vmatprep.subr.mxu0 0.0
        %713 = vmatpush1.msra.mxu0 %v589
        %714 = vmatprep.subr.mxu0 0.0
        %715 = vmatpush1.msra.mxu0 %v590
        %716 = vmatprep.subr.mxu0 0.0
        %717 = vmatpush1.msra.mxu0 %v591
        %718 = vmatprep.subr.mxu0 0.0
        %719 = vmatpush1.msra.mxu0 %v592
        %720 = vmatprep.subr.mxu0 0.0
        %721 = vmatpush1.msra.mxu0 %v593
        %722 = vmatprep.subr.mxu0 0.0
        %723 = vmatpush1.msra.mxu0 %v594
        %724 = vmatprep.subr.mxu0 0.0
        %725 = vmatpush1.msra.mxu0 %v595
        %726 = vmatprep.subr.mxu0 0.0
        %727 = vmatpush1.msra.mxu0 %v596
        %728 = vmatprep.subr.mxu0 0.0
        %729 = vmatpush1.msra.mxu0 %v597
        %730 = vmatprep.subr.mxu0 0.0
        %731 = vmatpush1.msra.mxu0 %v598
        %732 = vmatprep.subr.mxu0 0.0
        %733 = vmatpush1.msra.mxu0 %v599
        %734 = vmatprep.mubr.f32.mxu0 %v534
        %735 = vmatmul.mubr.f32.gmra.mrb[0].mxu0 %v533
        %v736 = vpop.f32.mrb[0].mxu0
        %v737 = vadd.f32 %v667, %v736
        %v738 = vpop.f32.mrb[0].mxu0
        %739 = vdwg.mxu0
        %v740 = vadd.f32 %v535, %v737
        %741 = vst [vmem:[#allocation2] sm:$0xff] %v740
        // Predicated region
        $region57: #{tpu_custom_call.1} parent=39 // pred_check
          %p742 = pneg %p281
        $region58: #{tpu_custom_call.1} parent=39 // pred_check_branch
          %744 = sbr.rel (%p742) target = $region60
        $region59: #{tpu_custom_call.1} parent=39 // pred_region
          %v745 = vld [vmem:[#allocation2] sm:$0xff]
          %v746 = vld [vmem:[%s4] sm:$0x1]
          %v748 = vlaneseq
          %v749 = vshrl.u32 %v748, 7
          %v750 = vsub.s32 0, %v749
          %v751 = vrot.slane %v746, %v750
          %v753 = vadd.f32 %v745, %v751
          %754 = vst [vmem:[%s280] sm:$0xff] %v753
        $region60: #{tpu_custom_call.1} parent=39 // pred_fallthru
          _
        %s755 = sand.u32 %s153, 1
        %s756 = scalar_lea.sflag [#allocation5], %s755
        %s757 = sand.u32 %s153, 1
        %s758 = smul.addr %s757, 8
        %s759 = scalar_lea.vmem [#allocation9], %s758
        // Predicated region
        $region61: #{tpu_custom_call.1} parent=39 // pred_check
          %p760 = pneg %p163
        $region62: #{tpu_custom_call.1} parent=39 // pred_check_branch
          %762 = sbr.rel (%p760) target = $region64
        $region63: #{tpu_custom_call.1} parent=39 // pred_region
          %s764 = ssub.s32 128, 128
          %765 = vsyncadd %s756, %s764
          %s766 = smul.addr %s27, 128
          %s767 = scalar_lea.hbm %s5, %s766
          %s769 = sshll.u32 %s759, 4
          %s770 = int_to_ptr.vmem [resolvable:$true] %s769
          %772 = dma.vmem_to_hbm [thread:$0]  %s770, 128, %s767, %s756
        $region64: #{tpu_custom_call.1} parent=39 // pred_fallthru
          _
      $region40: #{tpu_custom_call.1} parent=5 // pred_fallthru
        _
      %p773 = scmp.le.s32.totalorder 2, %s18
      // Predicated region
      $region65: #{tpu_custom_call.1} parent=5 // pred_check
        %p774 = pneg %p773
      $region66: #{tpu_custom_call.1} parent=5 // pred_check_branch
        %776 = sbr.rel (%p774) target = $region68
      $region67: #{tpu_custom_call.1} parent=5 // pred_region
        %s777 = ssub.s32 %s18, 2
        // Predicated region
        $region69: #{tpu_custom_call.1} parent=67 // pred_check
          %p778 = pneg %p169
        $region70: #{tpu_custom_call.1} parent=67 // pred_check_branch
          %780 = sbr.rel (%p778) target = $region72
        $region71: #{tpu_custom_call.1} parent=67 // pred_region
          %s781 = sand.u32 %s154, 1
          %s782 = scalar_lea.sflag [#allocation5], %s781
          %s783 = sand.u32 %s154, 1
          %s784 = smul.addr %s783, 8
          %s785 = scalar_lea.vmem [#allocation9], %s784
          %786 = dma.done %s782, 128
        $region72: #{tpu_custom_call.1} parent=67 // pred_fallthru
          _
      $region68: #{tpu_custom_call.1} parent=5 // pred_fallthru
        _
    $region6: #{tpu_custom_call.1} parent=1 // loop_footer
      %s22 = sadd.s32 1, %s18
    $region7: #{tpu_custom_call.1} parent=1 // loop_footer_branch
      %17 = sbr.rel target = $region3
    $region8: #{tpu_custom_call.1} parent=1 // loop_exit
      _
    %787 = vsyncpa [#allocation4], 1
    %s788 = scalar_lea.sflag [#allocation4], 1
    %789 = vsyncpa %s788, 1
    %790 = vsyncpa [#allocation7], 1
    %791 = vsyncpa [#allocation5], 1
    %s792 = scalar_lea.sflag [#allocation5], 1
    %793 = vsyncpa %s792, 1

</llo_original>
